<compile_context>
chip_gen: v7x
topology: tpu7x:2x2x1
jax: 0.10.0
libtpu: 0.0.40
codegen_flags: <defaults>
</compile_context>

<pallas_src>
import numpy as np
import jax
import jax.numpy as jnp
from jax.experimental import pallas as pl
from jax.experimental.pallas import tpu as pltpu


def diffusion_trainer_kernel(x0_ref, noise_ref, ca_ref, cb_ref, w_ref, bt_ref,
                             loss_ref):
    x0 = x0_ref[...]                      # (B*C, lane_block)
    noise = noise_ref[...]                # (B*C, lane_block)

    # q_sample: per-row coefficients (row = batch*channel), broadcast over lanes.
    x_t = ca_ref[...] * x0 + cb_ref[...] * noise

    # Synthetic model: batched 1x1 conv (block-diagonal channel mixing, one
    # matmul covers the whole batch) + folded (bias + time-embedding) add.
    pred = jnp.dot(w_ref[...], x_t, preferred_element_type=jnp.float32)
    pred = pred + bt_ref[...]

    # F.mse_loss(pred, noise, reduction='none')
    diff = pred - noise
    loss_ref[...] = diff * diff


def gaussian_diffusion_trainer(x_0, t, noise, sqrt_ab, sqrt_1m_ab, w, bias, temb):
    """x_0, noise: (B, C, H, W) f32; t: (B,) int32; sqrt_*: (T,) f32;
       w: (C, C) 1x1-conv weight; bias: (C, 1); temb: (T, C) embedding table."""
    B, C, H, W = x_0.shape
    HW = H * W
    BC = B * C

    # Fuse (B, C) onto the sublane axis -> dense (B*C, HW) layout.
    x0_f = x_0.reshape(BC, HW)
    noise_f = noise.reshape(BC, HW)

    # Wrapper-side gathers (extract()): per-row diffusion coefficients, (B*C, 1).
    ca = jnp.repeat(sqrt_ab[t], C).reshape(BC, 1)       # sqrt_alphas_bar[t[b]]
    cb = jnp.repeat(sqrt_1m_ab[t], C).reshape(BC, 1)    # sqrt(1 - alphas_bar[t[b]])

    # Fold the model bias into the per-batch time embedding: one add in-kernel.
    bt = (temb[t] + bias.reshape(1, C)).reshape(BC, 1)

    # Block-diagonal channel-mixing weight: one matmul for the whole batch.
    w_blk = jnp.kron(jnp.eye(B, dtype=w.dtype), w)      # (B*C, B*C)

    # 2-way parallel split of the lane axis (keeps both v7x TensorCores busy);
    # falls back to a single block when HW cannot be split into 128-lane tiles.
    n_lane_blocks = 2 if HW % 256 == 0 else 1
    lane_block = HW // n_lane_blocks

    loss_flat = pl.pallas_call(
        diffusion_trainer_kernel,
        out_shape=jax.ShapeDtypeStruct((BC, HW), jnp.float32),
        grid=(n_lane_blocks,),
        in_specs=[
            pl.BlockSpec((BC, lane_block), lambda j: (0, j)),   # x_0
            pl.BlockSpec((BC, lane_block), lambda j: (0, j)),   # noise
            pl.BlockSpec((BC, 1), lambda j: (0, 0)),            # sqrt_ab[t] per row
            pl.BlockSpec((BC, 1), lambda j: (0, 0)),            # sqrt_1m_ab[t] per row
            pl.BlockSpec((BC, BC), lambda j: (0, 0)),           # block-diag conv weight
            pl.BlockSpec((BC, 1), lambda j: (0, 0)),            # bias + temb[t]
        ],
        out_specs=pl.BlockSpec((BC, lane_block), lambda j: (0, j)),
        compiler_params=pltpu.CompilerParams(
            dimension_semantics=("parallel",)),
    )(x0_f, noise_f, ca, cb, w_blk, bt)

    return loss_flat.reshape(B, C, H, W)


if __name__ == "__main__":
    # small shapes: batch=2, channels=4, spatial=16x16, T=16
    B, C, H, W = 2, 4, 16, 16
    T_steps = 16
    beta_1, beta_T = 1e-4, 0.02

    # diffusion schedule (double precision, like register_buffer(...).double())
    betas = np.linspace(beta_1, beta_T, T_steps, dtype=np.float64)
    alphas = 1.0 - betas
    alphas_bar = np.cumprod(alphas, axis=0)
    sqrt_ab = jnp.asarray(np.sqrt(alphas_bar), dtype=jnp.float32)
    sqrt_1m_ab = jnp.asarray(np.sqrt(1.0 - alphas_bar), dtype=jnp.float32)

    # deterministic inputs / randomness (torch.randint / torch.randn_like analogues)
    key = jax.random.PRNGKey(0)
    k_x, k_t, k_n = jax.random.split(key, 3)
    x_0 = jax.random.normal(k_x, (B, C, H, W), dtype=jnp.float32)
    t = jax.random.randint(k_t, (B,), 0, T_steps, dtype=jnp.int32)
    noise = jax.random.normal(k_n, (B, C, H, W), dtype=jnp.float32)

    # deterministic synthetic model parameters
    w = (jnp.arange(C * C, dtype=jnp.float32).reshape(C, C) / (C * C)) - 0.5
    bias = (jnp.arange(C, dtype=jnp.float32).reshape(C, 1) * 0.1) - 0.15
    temb = jnp.sin(jnp.arange(T_steps * C, dtype=jnp.float32).reshape(T_steps, C) * 0.1)

    loss = gaussian_diffusion_trainer(x_0, t, noise, sqrt_ab, sqrt_1m_ab, w, bias, temb)
    loss = jax.block_until_ready(loss)

    # pure-JAX reference check
    coef_a = sqrt_ab[t].reshape(B, 1, 1, 1)
    coef_b = sqrt_1m_ab[t].reshape(B, 1, 1, 1)
    x_t_ref = coef_a * x_0 + coef_b * noise
    pred_ref = jnp.einsum("oc,bchw->bohw", w, x_t_ref) \
        + bias.reshape(1, C, 1, 1) + temb[t].reshape(B, C, 1, 1)
    loss_ref = (pred_ref - noise) ** 2
    np.testing.assert_allclose(np.asarray(loss), np.asarray(loss_ref),
                               rtol=1e-5, atol=1e-5)

    print("KERNEL_OK")
</pallas_src>

<mosaic_0001>
module attributes {stable_mosaic.version = 11 : i64} {
  func.func @diffusion_trainer_kernel(%arg0: i32, %arg1: memref<8x128xf32, #tpu.memory_space<vmem>>, %arg2: memref<8x128xf32, #tpu.memory_space<vmem>>, %arg3: memref<8x1xf32, #tpu.memory_space<vmem>>, %arg4: memref<8x1xf32, #tpu.memory_space<vmem>>, %arg5: memref<8x8xf32, #tpu.memory_space<vmem>>, %arg6: memref<8x1xf32, #tpu.memory_space<vmem>>, %arg7: memref<8x128xf32, #tpu.memory_space<vmem>>) attributes {dimension_semantics = [#tpu.dimension_semantics<parallel>], iteration_bounds = array<i64: 2>, scalar_prefetch = 0 : i64, scratch_operands = 0 : i64, tpu.core_type = #tpu.core_type<tc>, window_params = [{transform_indices = @transform_0, window_bounds = array<i64: 8, 128>}, {transform_indices = @transform_1, window_bounds = array<i64: 8, 128>}, {pipeline_mode = #tpu.pipeline_mode<synchronous>, transform_indices = @transform_2, window_bounds = array<i64: 8, 1>}, {pipeline_mode = #tpu.pipeline_mode<synchronous>, transform_indices = @transform_3, window_bounds = array<i64: 8, 1>}, {pipeline_mode = #tpu.pipeline_mode<synchronous>, transform_indices = @transform_4, window_bounds = array<i64: 8, 8>}, {pipeline_mode = #tpu.pipeline_mode<synchronous>, transform_indices = @transform_5, window_bounds = array<i64: 8, 1>}, {transform_indices = @transform_6, window_bounds = array<i64: 8, 128>}]} {
    %c0 = arith.constant 0 : index
    %c0_0 = arith.constant 0 : index
    %0 = vector.load %arg1[%c0, %c0_0] : memref<8x128xf32, #tpu.memory_space<vmem>>, vector<8x128xf32>
    %c0_1 = arith.constant 0 : index
    %c0_2 = arith.constant 0 : index
    %1 = vector.load %arg2[%c0_1, %c0_2] : memref<8x128xf32, #tpu.memory_space<vmem>>, vector<8x128xf32>
    %c0_3 = arith.constant 0 : index
    %c0_4 = arith.constant 0 : index
    %2 = vector.load %arg3[%c0_3, %c0_4] : memref<8x1xf32, #tpu.memory_space<vmem>>, vector<8x1xf32>
    %3 = vector.broadcast %2 : vector<8x1xf32> to vector<8x128xf32>
    %4 = arith.mulf %3, %0 : vector<8x128xf32>
    %c0_5 = arith.constant 0 : index
    %c0_6 = arith.constant 0 : index
    %5 = vector.load %arg4[%c0_5, %c0_6] : memref<8x1xf32, #tpu.memory_space<vmem>>, vector<8x1xf32>
    %6 = vector.broadcast %5 : vector<8x1xf32> to vector<8x128xf32>
    %7 = arith.mulf %6, %1 : vector<8x128xf32>
    %8 = arith.addf %4, %7 : vector<8x128xf32>
    %c0_7 = arith.constant 0 : index
    %c0_8 = arith.constant 0 : index
    %9 = vector.load %arg5[%c0_7, %c0_8] : memref<8x8xf32, #tpu.memory_space<vmem>>, vector<8x8xf32>
    %cst = arith.constant dense<0.000000e+00> : vector<8x128xf32>
    %10 = tpu.matmul %9, %8, %cst {dimension_numbers = #tpu.dot_dimension_numbers<[1], [0], [0], [1], [0, 0, 1, 1], [], []>} : vector<8x8xf32>, vector<8x128xf32>, vector<8x128xf32> -> vector<8x128xf32>
    %c0_9 = arith.constant 0 : index
    %c0_10 = arith.constant 0 : index
    %11 = vector.load %arg6[%c0_9, %c0_10] : memref<8x1xf32, #tpu.memory_space<vmem>>, vector<8x1xf32>
    %12 = vector.broadcast %11 : vector<8x1xf32> to vector<8x128xf32>
    %13 = arith.addf %10, %12 : vector<8x128xf32>
    %14 = arith.subf %13, %1 : vector<8x128xf32>
    %15 = arith.mulf %14, %14 : vector<8x128xf32>
    %c0_11 = arith.constant 0 : index
    %c0_12 = arith.constant 0 : index
    %16 = vector.load %arg7[%c0_11, %c0_12] : memref<8x128xf32, #tpu.memory_space<vmem>>, vector<8x128xf32>
    tpu.vector_store %arg7[%c0_11, %c0_12], %15 {strides = array<i32>} : memref<8x128xf32, #tpu.memory_space<vmem>>, vector<8x128xf32>,
    return
  }
  func.func @transform_0(%arg0: i32) -> (i32, i32) {
    %c0_i32 = arith.constant 0 : i32
    %c0_i32_0 = arith.constant 0 : i32
    return %c0_i32, %arg0 : i32, i32
  }
  func.func @transform_1(%arg0: i32) -> (i32, i32) {
    %c0_i32 = arith.constant 0 : i32
    %c0_i32_0 = arith.constant 0 : i32
    return %c0_i32, %arg0 : i32, i32
  }
  func.func @transform_2(%arg0: i32) -> (i32, i32) {
    %c0_i32 = arith.constant 0 : i32
    %c0_i32_0 = arith.constant 0 : i32
    %c0_i32_1 = arith.constant 0 : i32
    return %c0_i32, %c0_i32_0 : i32, i32
  }
  func.func @transform_3(%arg0: i32) -> (i32, i32) {
    %c0_i32 = arith.constant 0 : i32
    %c0_i32_0 = arith.constant 0 : i32
    %c0_i32_1 = arith.constant 0 : i32
    return %c0_i32, %c0_i32_0 : i32, i32
  }
  func.func @transform_4(%arg0: i32) -> (i32, i32) {
    %c0_i32 = arith.constant 0 : i32
    %c0_i32_0 = arith.constant 0 : i32
    %c0_i32_1 = arith.constant 0 : i32
    return %c0_i32, %c0_i32_0 : i32, i32
  }
  func.func @transform_5(%arg0: i32) -> (i32, i32) {
    %c0_i32 = arith.constant 0 : i32
    %c0_i32_0 = arith.constant 0 : i32
    %c0_i32_1 = arith.constant 0 : i32
    return %c0_i32, %c0_i32_0 : i32, i32
  }
  func.func @transform_6(%arg0: i32) -> (i32, i32) {
    %c0_i32 = arith.constant 0 : i32
    %c0_i32_0 = arith.constant 0 : i32
    return %c0_i32, %arg0 : i32, i32
  }
}

</mosaic_0001>

<llo_original>
// kernel: tpu_custom_call.1
$region0: #{tpu_custom_call.1}
  #allocation0 [shape = 'u32[]', space=smem, size = 0x4, offset = 0x4, fixed_abs, tag = 'smem constant byte address 0x4 - core index']
  #allocation1 [shape = 'u32[144,128]{1,0:T(1,128)}', space=vmem, size = 0x12000, scoped, tag = 'internal scratch']
  %s0 = inlined_call_operand.vmem [shape: f32[8,256], index: 0, kind: input, shape index: {}]
  %s1 = inlined_call_operand.hbm [shape: f32[8,256], index: 1, kind: input, shape index: {}]
  %s2 = inlined_call_operand.vmem [shape: f32[8,1], index: 2, kind: input, shape index: {}]
  %s3 = inlined_call_operand.vmem [shape: f32[8,1], index: 3, kind: input, shape index: {}]
  %s4 = inlined_call_operand.vmem [shape: f32[8,8], index: 4, kind: input, shape index: {}]
  %s5 = inlined_call_operand.vmem [shape: f32[8,1], index: 5, kind: input, shape index: {}]
  %s6 = inlined_call_operand.hbm [shape: f32[8,256], index: 6, kind: output, shape index: {}]
  %s7 = sld [smem:[#allocation0]]
  $region61: #{tpu_custom_call.1} parent=0
    _
  %s9 = ssub.s32 1, %s7
  %s10 = scalar_select 0, %s9, %s7
  $region1: #{tpu_custom_call.1} parent=0
    #allocation2 [shape = 'u8[8192]{0}', space=vmem, size = 0x2000, scoped, tag = 'input window, operand 1']
    #allocation3 [shape = 's32[2]{0}', space=sflag, size = 0x8, scoped, tag = 'scoped memory for tpu_custom_call.1']
    #allocation4 [shape = 's32[2]{0}', space=sflag, size = 0x8, scoped, tag = 'scoped memory for tpu_custom_call.1']
    #allocation5 [shape = 'u8[8192]{0}', space=vmem, size = 0x2000, scoped, tag = 'output window, operand 0']
    %11 = vsyncpa [#allocation3], 0
    %s12 = scalar_lea.sflag [#allocation3], 1
    %13 = vsyncpa %s12, 0
    %14 = vsyncpa [#allocation4], 0
    %s15 = scalar_lea.sflag [#allocation4], 1
    %16 = vsyncpa %s15, 0
    loop: start=0, step=1, limit=4
    $region2: #{tpu_custom_call.1} parent=1 // loop_pre_header
      _
    $region3: #{tpu_custom_call.1} parent=1 // loop_header
      %s18 = sphi 0, %s22
      %p19 = scmp.ge.s32.totalorder %s18, 4
      %s28 = sphi 0, %s30
      %s31 = sphi 0, %s28
      %s32 = sphi 0, %s31
      %s48 = sphi 0, %s32
      %s54 = sphi 0, %s56
      %s57 = sphi 0, %s54
      %s58 = sphi 0, %s57
      %s74 = sphi 0, %s58
      %s78 = sphi 0, %s78
      %s80 = sphi 0, %s78
      %s81 = sphi 0, %s80
      %s95 = sphi 0, %s81
      %s99 = sphi 0, %s99
      %s101 = sphi 0, %s99
      %s102 = sphi 0, %s101
      %s116 = sphi 0, %s102
      %s120 = sphi 0, %s120
      %s122 = sphi 0, %s120
      %s123 = sphi 0, %s122
      %s137 = sphi 0, %s123
      %s141 = sphi 0, %s141
      %s143 = sphi 0, %s141
      %s144 = sphi 0, %s143
      %s158 = sphi 0, %s144
      %s164 = sphi 0, %s166
      %s167 = sphi 0, %s164
      %s168 = sphi 0, %s167
      %s184 = sphi 0, %s168
    $region4: #{tpu_custom_call.1} parent=1 // loop_header_branch
      %21 = sbr.rel (%p19) target = $region8
    $region5: #{tpu_custom_call.1} parent=1 // loop_body
      %s23 = ssub.s32 %s18, 1
      %s24 = ssub.s32 %s18, 2
      %s25 = sadd.s32 %s18, 1
      %s26 = ssub.s32 %s18, %s25
      %p27 = scmp.eq.s32.totalorder %s26, 0
      %s29 = sadd.s32 %s28, 1
      %s30 = scalar_select %p27, %s28, %s29
      %p33 = pneg %p27
      %p34 = scmp.eq.s32.totalorder %s18, 1
      %p35 = por %p33, %p34
      %p36 = scmp.ne.s32.totalorder %s28, %s31
      %p37 = scmp.eq.s32.totalorder %s18, 0
      %p38 = por %p36, %p37
      %p39 = scmp.ne.s32.totalorder %s28, %s31
      %p40 = scmp.eq.s32.totalorder %s23, 1
      %p41 = por %p39, %p40
      %p42 = scmp.ne.s32.totalorder %s31, %s32
      %p43 = scmp.eq.s32.totalorder %s23, 0
      %p44 = por %p42, %p43
      %p45 = scmp.ne.s32.totalorder %s31, %s32
      %p46 = scmp.eq.s32.totalorder %s24, 1
      %p47 = por %p45, %p46
      %p49 = scmp.ne.s32.totalorder %s32, %s48
      %p50 = scmp.eq.s32.totalorder %s24, 0
      %p51 = por %p49, %p50
      %s52 = ssub.s32 %s18, %s25
      %p53 = scmp.eq.s32.totalorder %s52, 0
      %s55 = sadd.s32 %s54, 1
      %s56 = scalar_select %p53, %s54, %s55
      %p59 = pneg %p53
      %p60 = scmp.eq.s32.totalorder %s18, 1
      %p61 = por %p59, %p60
      %p62 = scmp.ne.s32.totalorder %s54, %s57
      %p63 = scmp.eq.s32.totalorder %s18, 0
      %p64 = por %p62, %p63
      %p65 = scmp.ne.s32.totalorder %s54, %s57
      %p66 = scmp.eq.s32.totalorder %s23, 1
      %p67 = por %p65, %p66
      %p68 = scmp.ne.s32.totalorder %s57, %s58
      %p69 = scmp.eq.s32.totalorder %s23, 0
      %p70 = por %p68, %p69
      %p71 = scmp.ne.s32.totalorder %s57, %s58
      %p72 = scmp.eq.s32.totalorder %s24, 1
      %p73 = por %p71, %p72
      %p75 = scmp.ne.s32.totalorder %s58, %s74
      %p76 = scmp.eq.s32.totalorder %s24, 0
      %p77 = por %p75, %p76
      %s79 = sadd.s32 %s78, 1
      %p82 = scmp.eq.s32.totalorder %s18, 1
      %p83 = scmp.ne.s32.totalorder %s78, %s80
      %p84 = scmp.eq.s32.totalorder %s18, 0
      %p85 = por %p83, %p84
      %p86 = scmp.ne.s32.totalorder %s78, %s80
      %p87 = scmp.eq.s32.totalorder %s23, 1
      %p88 = por %p86, %p87
      %p89 = scmp.ne.s32.totalorder %s80, %s81
      %p90 = scmp.eq.s32.totalorder %s23, 0
      %p91 = por %p89, %p90
      %p92 = scmp.ne.s32.totalorder %s80, %s81
      %p93 = scmp.eq.s32.totalorder %s24, 1
      %p94 = por %p92, %p93
      %p96 = scmp.ne.s32.totalorder %s81, %s95
      %p97 = scmp.eq.s32.totalorder %s24, 0
      %p98 = por %p96, %p97
      %s100 = sadd.s32 %s99, 1
      %p103 = scmp.eq.s32.totalorder %s18, 1
      %p104 = scmp.ne.s32.totalorder %s99, %s101
      %p105 = scmp.eq.s32.totalorder %s18, 0
      %p106 = por %p104, %p105
      %p107 = scmp.ne.s32.totalorder %s99, %s101
      %p108 = scmp.eq.s32.totalorder %s23, 1
      %p109 = por %p107, %p108
      %p110 = scmp.ne.s32.totalorder %s101, %s102
      %p111 = scmp.eq.s32.totalorder %s23, 0
      %p112 = por %p110, %p111
      %p113 = scmp.ne.s32.totalorder %s101, %s102
      %p114 = scmp.eq.s32.totalorder %s24, 1
      %p115 = por %p113, %p114
      %p117 = scmp.ne.s32.totalorder %s102, %s116
      %p118 = scmp.eq.s32.totalorder %s24, 0
      %p119 = por %p117, %p118
      %s121 = sadd.s32 %s120, 1
      %p124 = scmp.eq.s32.totalorder %s18, 1
      %p125 = scmp.ne.s32.totalorder %s120, %s122
      %p126 = scmp.eq.s32.totalorder %s18, 0
      %p127 = por %p125, %p126
      %p128 = scmp.ne.s32.totalorder %s120, %s122
      %p129 = scmp.eq.s32.totalorder %s23, 1
      %p130 = por %p128, %p129
      %p131 = scmp.ne.s32.totalorder %s122, %s123
      %p132 = scmp.eq.s32.totalorder %s23, 0
      %p133 = por %p131, %p132
      %p134 = scmp.ne.s32.totalorder %s122, %s123
      %p135 = scmp.eq.s32.totalorder %s24, 1
      %p136 = por %p134, %p135
      %p138 = scmp.ne.s32.totalorder %s123, %s137
      %p139 = scmp.eq.s32.totalorder %s24, 0
      %p140 = por %p138, %p139
      %s142 = sadd.s32 %s141, 1
      %p145 = scmp.eq.s32.totalorder %s18, 1
      %p146 = scmp.ne.s32.totalorder %s141, %s143
      %p147 = scmp.eq.s32.totalorder %s18, 0
      %p148 = por %p146, %p147
      %p149 = scmp.ne.s32.totalorder %s141, %s143
      %p150 = scmp.eq.s32.totalorder %s23, 1
      %p151 = por %p149, %p150
      %p152 = scmp.ne.s32.totalorder %s143, %s144
      %p153 = scmp.eq.s32.totalorder %s23, 0
      %p154 = por %p152, %p153
      %p155 = scmp.ne.s32.totalorder %s143, %s144
      %p156 = scmp.eq.s32.totalorder %s24, 1
      %p157 = por %p155, %p156
      %p159 = scmp.ne.s32.totalorder %s144, %s158
      %p160 = scmp.eq.s32.totalorder %s24, 0
      %p161 = por %p159, %p160
      %s162 = ssub.s32 %s18, %s25
      %p163 = scmp.eq.s32.totalorder %s162, 0
      %s165 = sadd.s32 %s164, 1
      %s166 = scalar_select %p163, %s164, %s165
      %p169 = pneg %p163
      %p170 = scmp.eq.s32.totalorder %s18, 1
      %p171 = por %p169, %p170
      %p172 = scmp.ne.s32.totalorder %s164, %s167
      %p173 = scmp.eq.s32.totalorder %s18, 0
      %p174 = por %p172, %p173
      %p175 = scmp.ne.s32.totalorder %s164, %s167
      %p176 = scmp.eq.s32.totalorder %s23, 1
      %p177 = por %p175, %p176
      %p178 = scmp.ne.s32.totalorder %s167, %s168
      %p179 = scmp.eq.s32.totalorder %s23, 0
      %p180 = por %p178, %p179
      %p181 = scmp.ne.s32.totalorder %s167, %s168
      %p182 = scmp.eq.s32.totalorder %s24, 1
      %p183 = por %p181, %p182
      %p185 = scmp.ne.s32.totalorder %s168, %s184
      %p186 = scmp.eq.s32.totalorder %s24, 0
      %p187 = por %p185, %p186
      %p188 = scmp.le.s32.totalorder 1, %s18
      %p189 = scmp.lt.s32.totalorder %s18, 3
      %p190 = pnand %p188, %p189
      %p191 = pneg %p190
      // Predicated region
      $region9: #{tpu_custom_call.1} parent=5 // pred_check
        _
      $region10: #{tpu_custom_call.1} parent=5 // pred_check_branch
        %193 = sbr.rel (%p190) target = $region12
      $region11: #{tpu_custom_call.1} parent=5 // pred_region
        %s194 = ssub.s32 %s18, 1
        // Predicated region
        $region13: #{tpu_custom_call.1} parent=11 // pred_check
          %p195 = pneg %p91
        $region14: #{tpu_custom_call.1} parent=11 // pred_check_branch
          %197 = sbr.rel (%p195) target = $region16
        $region15: #{tpu_custom_call.1} parent=11 // pred_region
          _
        $region16: #{tpu_custom_call.1} parent=11 // pred_fallthru
          _
        // Predicated region
        $region17: #{tpu_custom_call.1} parent=11 // pred_check
          %p198 = pneg %p112
        $region18: #{tpu_custom_call.1} parent=11 // pred_check_branch
          %200 = sbr.rel (%p198) target = $region20
        $region19: #{tpu_custom_call.1} parent=11 // pred_region
          _
        $region20: #{tpu_custom_call.1} parent=11 // pred_fallthru
          _
        // Predicated region
        $region21: #{tpu_custom_call.1} parent=11 // pred_check
          %p201 = pneg %p133
        $region22: #{tpu_custom_call.1} parent=11 // pred_check_branch
          %203 = sbr.rel (%p201) target = $region24
        $region23: #{tpu_custom_call.1} parent=11 // pred_region
          _
        $region24: #{tpu_custom_call.1} parent=11 // pred_fallthru
          _
        // Predicated region
        $region25: #{tpu_custom_call.1} parent=11 // pred_check
          %p204 = pneg %p154
        $region26: #{tpu_custom_call.1} parent=11 // pred_check_branch
          %206 = sbr.rel (%p204) target = $region28
        $region27: #{tpu_custom_call.1} parent=11 // pred_region
          _
        $region28: #{tpu_custom_call.1} parent=11 // pred_fallthru
          _
      $region12: #{tpu_custom_call.1} parent=5 // pred_fallthru
        _
      %p207 = scmp.lt.s32.totalorder %s18, 2
      // Predicated region
      $region29: #{tpu_custom_call.1} parent=5 // pred_check
        %p208 = pneg %p207
      $region30: #{tpu_custom_call.1} parent=5 // pred_check_branch
        %210 = sbr.rel (%p208) target = $region32
      $region31: #{tpu_custom_call.1} parent=5 // pred_region
        // Predicated region
        $region33: #{tpu_custom_call.1} parent=31 // pred_check
          %p211 = pneg %p38
        $region34: #{tpu_custom_call.1} parent=31 // pred_check_branch
          %213 = sbr.rel (%p211) target = $region36
        $region35: #{tpu_custom_call.1} parent=31 // pred_region
          %p214 = scmp.lt.s32.totalorder %s18, 1
          %s215 = scalar_select %p214, %s18, 1
          %s216 = smul.addr %s215, 8
          %s217 = scalar_lea.vmem %s0, %s216
        $region36: #{tpu_custom_call.1} parent=31 // pred_fallthru
          _
        // Predicated region
        $region37: #{tpu_custom_call.1} parent=31 // pred_check
          %p218 = pneg %p64
        $region38: #{tpu_custom_call.1} parent=31 // pred_check_branch
          %220 = sbr.rel (%p218) target = $region40
        $region39: #{tpu_custom_call.1} parent=31 // pred_region
          %s221 = sand.u32 %s54, 1
          %s222 = scalar_lea.sflag [#allocation3], %s221
          %s223 = sand.u32 %s54, 1
          %s224 = smul.addr %s223, 8
          %s225 = scalar_lea.vmem [#allocation2], %s224
          %s227 = ssub.s32 128, 128
          %228 = vsyncadd %s222, %s227
          %s229 = smul.addr %s18, 128
          %s230 = scalar_lea.hbm %s1, %s229
          %s232 = sshll.u32 %s225, 4
          %s233 = int_to_ptr.vmem [resolvable:$true] %s232
          %235 = dma.hbm_to_vmem [thread:$0]  %s230, 128, %s233, %s222
        $region40: #{tpu_custom_call.1} parent=31 // pred_fallthru
          _
      $region32: #{tpu_custom_call.1} parent=5 // pred_fallthru
        _
      %p236 = scmp.le.s32.totalorder 1, %s18
      %p237 = scmp.lt.s32.totalorder %s18, 3
      %p238 = pnand %p236, %p237
      %p239 = pneg %p238
      // Predicated region
      $region41: #{tpu_custom_call.1} parent=5 // pred_check
        _
      $region42: #{tpu_custom_call.1} parent=5 // pred_check_branch
        %241 = sbr.rel (%p238) target = $region44
      $region43: #{tpu_custom_call.1} parent=5 // pred_region
        %s242 = ssub.s32 %s18, 1
        %s243 = sand.u32 %s57, 1
        %s244 = scalar_lea.sflag [#allocation3], %s243
        %s245 = sand.u32 %s57, 1
        %s246 = smul.addr %s245, 8
        %s247 = scalar_lea.vmem [#allocation2], %s246
        // Predicated region
        $region45: #{tpu_custom_call.1} parent=43 // pred_check
          %p248 = pneg %p70
        $region46: #{tpu_custom_call.1} parent=43 // pred_check_branch
          %250 = sbr.rel (%p248) target = $region48
        $region47: #{tpu_custom_call.1} parent=43 // pred_region
          %251 = dma.done %s244, 128
        $region48: #{tpu_custom_call.1} parent=43 // pred_fallthru
          _
        %p252 = scmp.lt.s32.totalorder %s23, 1
        %s253 = scalar_select %p252, %s23, 1
        %s254 = smul.addr %s253, 8
        %s255 = scalar_lea.vmem %s0, %s254
        %p256 = pneg %p44
        %p257 = pneg %p41
        %s258 = sand.u32 %s57, 1
        %s259 = scalar_lea.sflag [#allocation3], %s258
        %s260 = sand.u32 %s57, 1
        %s261 = smul.addr %s260, 8
        %s262 = scalar_lea.vmem [#allocation2], %s261
        %p263 = pneg %p70
        %p264 = pneg %p67
        %p265 = pneg %p91
        %p266 = pneg %p88
        %p267 = pneg %p112
        %p268 = pneg %p109
        %p269 = pneg %p133
        %p270 = pneg %p130
        %p271 = pneg %p154
        %p272 = pneg %p151
        %p273 = pneg %p180
        %p274 = pneg %p177
        %s275 = sand.u32 %s167, 1
        %s276 = scalar_lea.sflag [#allocation4], %s275
        %s277 = sand.u32 %s167, 1
        %s278 = smul.addr %s277, 8
        %s279 = scalar_lea.vmem [#allocation5], %s278
        %p280 = scmp.lt.s32.totalorder %s23, 1
        %s281 = scalar_select %p280, %s23, 1
        %s282 = smul.addr %s281, 8
        %s283 = scalar_lea.vmem %s0, %s282
        %v284 = vld [vmem:[%s283] sm:$0xff]
        %v285 = vld [vmem:[%s247] sm:$0xff]
        %v286 = vld [vmem:[%s2] sm:$0xff]
        %288 = vset.pattern.permute.xlu0 0
        %289 = vperm.xlu0 %288, %v286
        %v290 = vpop.permute.xlu0 %289
        %v292 = vmul.f32 %v290, %v284
        %v293 = vld [vmem:[%s3] sm:$0xff]
        %295 = vset.pattern.permute.xlu0 0
        %296 = vperm.xlu0 %295, %v293
        %v297 = vpop.permute.xlu0 %296
        %v299 = vmul.f32 %v297, %v285
        %v300 = vadd.f32 %v292, %v299
        %v301 = vld [vmem:[%s4] sm:$0xff]
        %v302 = vld [vmem:[%s5] sm:$0xff]
        %304 = vset.pattern.permute.xlu0 0
        %305 = vperm.xlu0 %304, %v302
        %v306 = vpop.permute.xlu0 %305
        %vm308 = vcmask 64512
        %v310 = vsel %vm308, %v301, 0
        %312 = vmatprep.subr.mxu0 0.0
        %313 = vmatpush1.msra.mxu0 %v300
        %314 = vmatprep.subr.mxu0 0.0
        %315 = vmatpush1.msra.mxu0 0.0
        %316 = vmatprep.subr.mxu0 0.0
        %317 = vmatpush1.msra.mxu0 0.0
        %318 = vmatprep.subr.mxu0 0.0
        %319 = vmatpush1.msra.mxu0 0.0
        %320 = vmatprep.subr.mxu0 0.0
        %321 = vmatpush1.msra.mxu0 0.0
        %322 = vmatprep.subr.mxu0 0.0
        %323 = vmatpush1.msra.mxu0 0.0
        %324 = vmatprep.subr.mxu0 0.0
        %325 = vmatpush1.msra.mxu0 0.0
        %326 = vmatprep.subr.mxu0 0.0
        %327 = vmatpush1.msra.mxu0 0.0
        %328 = vmatprep.subr.mxu0 0.0
        %329 = vmatpush1.msra.mxu0 0.0
        %330 = vmatprep.subr.mxu0 0.0
        %331 = vmatpush1.msra.mxu0 0.0
        %332 = vmatprep.subr.mxu0 0.0
        %333 = vmatpush1.msra.mxu0 0.0
        %334 = vmatprep.subr.mxu0 0.0
        %335 = vmatpush1.msra.mxu0 0.0
        %336 = vmatprep.subr.mxu0 0.0
        %337 = vmatpush1.msra.mxu0 0.0
        %338 = vmatprep.subr.mxu0 0.0
        %339 = vmatpush1.msra.mxu0 0.0
        %340 = vmatprep.subr.mxu0 0.0
        %341 = vmatpush1.msra.mxu0 0.0
        %342 = vmatprep.subr.mxu0 0.0
        %343 = vmatpush1.msra.mxu0 0.0
        %344 = vmatprep.subr.mxu0 0.0
        %345 = vmatpush1.msra.mxu0 0.0
        %346 = vmatprep.subr.mxu0 0.0
        %347 = vmatpush1.msra.mxu0 0.0
        %348 = vmatprep.subr.mxu0 0.0
        %349 = vmatpush1.msra.mxu0 0.0
        %350 = vmatprep.subr.mxu0 0.0
        %351 = vmatpush1.msra.mxu0 0.0
        %352 = vmatprep.subr.mxu0 0.0
        %353 = vmatpush1.msra.mxu0 0.0
        %354 = vmatprep.subr.mxu0 0.0
        %355 = vmatpush1.msra.mxu0 0.0
        %356 = vmatprep.subr.mxu0 0.0
        %357 = vmatpush1.msra.mxu0 0.0
        %358 = vmatprep.subr.mxu0 0.0
        %359 = vmatpush1.msra.mxu0 0.0
        %360 = vmatprep.subr.mxu0 0.0
        %361 = vmatpush1.msra.mxu0 0.0
        %362 = vmatprep.subr.mxu0 0.0
        %363 = vmatpush1.msra.mxu0 0.0
        %364 = vmatprep.subr.mxu0 0.0
        %365 = vmatpush1.msra.mxu0 0.0
        %366 = vmatprep.subr.mxu0 0.0
        %367 = vmatpush1.msra.mxu0 0.0
        %368 = vmatprep.subr.mxu0 0.0
        %369 = vmatpush1.msra.mxu0 0.0
        %370 = vmatprep.subr.mxu0 0.0
        %371 = vmatpush1.msra.mxu0 0.0
        %372 = vmatprep.subr.mxu0 0.0
        %373 = vmatpush1.msra.mxu0 0.0
        %374 = vmatprep.subr.mxu0 0.0
        %375 = vmatpush1.msra.mxu0 0.0
        %376 = vmatprep.mubr.f32.mxu0 0.0
        %377 = vmatmul.mubr.f32.gmra.mrb[0].mxu0 %v310
        %v378 = vpop.f32.mrb[0].mxu0
        %v379 = vadd.f32 %v306, %v378
        %v380 = vpop.f32.mrb[0].mxu0
        %381 = vdwg.mxu0
        %v382 = vsub.f32 %v379, %v285
        %v383 = vmul.f32 %v382, %v382
        %384 = vst [vmem:[%s279] sm:$0xff] %v383
        %s385 = sand.u32 %s167, 1
        %s386 = scalar_lea.sflag [#allocation4], %s385
        %s387 = sand.u32 %s167, 1
        %s388 = smul.addr %s387, 8
        %s389 = scalar_lea.vmem [#allocation5], %s388
        // Predicated region
        $region49: #{tpu_custom_call.1} parent=43 // pred_check
          %p390 = pneg %p177
        $region50: #{tpu_custom_call.1} parent=43 // pred_check_branch
          %392 = sbr.rel (%p390) target = $region52
        $region51: #{tpu_custom_call.1} parent=43 // pred_region
          %s394 = ssub.s32 128, 128
          %395 = vsyncadd %s386, %s394
          %s396 = smul.addr %s23, 128
          %s397 = scalar_lea.hbm %s6, %s396
          %s399 = sshll.u32 %s389, 4
          %s400 = int_to_ptr.vmem [resolvable:$true] %s399
          %402 = dma.vmem_to_hbm [thread:$0]  %s400, 128, %s397, %s386
        $region52: #{tpu_custom_call.1} parent=43 // pred_fallthru
          _
      $region44: #{tpu_custom_call.1} parent=5 // pred_fallthru
        _
      %p403 = scmp.le.s32.totalorder 2, %s18
      // Predicated region
      $region53: #{tpu_custom_call.1} parent=5 // pred_check
        %p404 = pneg %p403
      $region54: #{tpu_custom_call.1} parent=5 // pred_check_branch
        %406 = sbr.rel (%p404) target = $region56
      $region55: #{tpu_custom_call.1} parent=5 // pred_region
        %s407 = ssub.s32 %s18, 2
        // Predicated region
        $region57: #{tpu_custom_call.1} parent=55 // pred_check
          %p408 = pneg %p183
        $region58: #{tpu_custom_call.1} parent=55 // pred_check_branch
          %410 = sbr.rel (%p408) target = $region60
        $region59: #{tpu_custom_call.1} parent=55 // pred_region
          %s411 = sand.u32 %s168, 1
          %s412 = scalar_lea.sflag [#allocation4], %s411
          %s413 = sand.u32 %s168, 1
          %s414 = smul.addr %s413, 8
          %s415 = scalar_lea.vmem [#allocation5], %s414
          %416 = dma.done %s412, 128
        $region60: #{tpu_custom_call.1} parent=55 // pred_fallthru
          _
      $region56: #{tpu_custom_call.1} parent=5 // pred_fallthru
        _
    $region6: #{tpu_custom_call.1} parent=1 // loop_footer
      %s22 = sadd.s32 1, %s18
    $region7: #{tpu_custom_call.1} parent=1 // loop_footer_branch
      %17 = sbr.rel target = $region3
    $region8: #{tpu_custom_call.1} parent=1 // loop_exit
      _
    %417 = vsyncpa [#allocation3], 1
    %s418 = scalar_lea.sflag [#allocation3], 1
    %419 = vsyncpa %s418, 1
    %420 = vsyncpa [#allocation4], 1
    %s421 = scalar_lea.sflag [#allocation4], 1
    %422 = vsyncpa %s421, 1

</llo_original>
